<compile_context>
chip_gen: v5e
topology: v5e:2x2
jax: 0.10.0
libtpu: 0.0.40
codegen_flags: <defaults>
</compile_context>

<pallas_src>
import functools

import jax
import jax.numpy as jnp
from jax import lax
from jax.experimental import pallas as pl
from jax.experimental.pallas import tpu as pltpu


# --------------------------------------------------------------------------- #
# Pool kernel: streaming spatial-sum accumulation.
# --------------------------------------------------------------------------- #
def _accum_tile(x_ref, acc_ref, start, hw_valid, *, masked):
    """Accumulate one (1, C, T) tile of x into the (1, C, 128) f32 accumulator.

    Per-128-lane-group loads are cast to f32 on the fly; the group partials are
    carried in registers (or compiler-managed temps for large C) and added to
    acc_ref exactly once per tile.  `masked` zeroes lanes whose global spatial
    index is >= hw_valid (partial last tile / split padding).
    """
    C = x_ref.shape[1]
    T = x_ref.shape[2]
    n_groups = T // 128

    if masked:
        lane = lax.broadcasted_iota(jnp.int32, (1, C, 128), 2)

    def group_val(g):
        if isinstance(g, int):
            base = g * 128
        else:
            base = pl.multiple_of(g * 128, 128)
        v = x_ref[:, :, pl.ds(base, 128)].astype(jnp.float32)
        if masked:
            pos = start + base + lane
            v = jnp.where(pos < hw_valid, v, 0.0)
        return v

    if n_groups <= 16:
        part = group_val(0)
        for g in range(1, n_groups):
            part = part + group_val(g)
    else:
        def body(g, carry):
            return carry + group_val(g)
        part = lax.fori_loop(0, n_groups, body,
                             jnp.zeros((1, C, 128), jnp.float32),
                             unroll=8)

    acc_ref[...] += part


def bcp_pool_kernel(x_ref, out_ref, acc_ref, *, hw_valid, tiles_per_split,
                    needs_mask):
    """grid = (N, n_split, tiles_per_split). Partial spatial sums per (n, s)."""
    s = pl.program_id(1)
    k = pl.program_id(2)
    num_k = pl.num_programs(2)

    @pl.when(k == 0)
    def _init():
        acc_ref[...] = jnp.zeros_like(acc_ref)

    T = x_ref.shape[-1]
    t = s * tiles_per_split + k          # global spatial-tile index
    start = t * T                        # first spatial element of this tile

    if needs_mask:
        @pl.when(start + T <= hw_valid)
        def _full_tile():
            _accum_tile(x_ref, acc_ref, start, hw_valid, masked=False)

        @pl.when(start + T > hw_valid)
        def _partial_tile():
            _accum_tile(x_ref, acc_ref, start, hw_valid, masked=True)
    else:
        _accum_tile(x_ref, acc_ref, start, hw_valid, masked=False)

    # Lane (XLU) reduce + relayout only once per (n, s).
    @pl.when(k == num_k - 1)
    def _finalize():
        out_ref[...] = jnp.sum(acc_ref[...], axis=-1).reshape(out_ref.shape)


# --------------------------------------------------------------------------- #
# Head kernel: mean -> fc1 -> GELU -> fc2 -> softmax -> bin centers.
# --------------------------------------------------------------------------- #
def bcp_head_kernel(psum_ref, w1_ref, b1_ref, w2_ref, b2_ref, tri_ref, out_ref,
                    *, hw_total, max_depth, min_depth):
    n_split = psum_ref.shape[1]
    pooled = psum_ref[:, 0, 0, :].astype(jnp.float32)          # (N, C)
    for s in range(1, n_split):
        pooled = pooled + psum_ref[:, s, 0, :].astype(jnp.float32)
    pooled = pooled * (1.0 / float(hw_total))                  # mean

    # fc1 + exact (erf) GELU, matching torch.nn.GELU default.
    h = jnp.dot(pooled, w1_ref[...].astype(jnp.float32),
                preferred_element_type=jnp.float32)
    h = h + b1_ref[...].astype(jnp.float32)
    h = jax.nn.gelu(h, approximate=False)

    # fc2
    y = jnp.dot(h, w2_ref[...].astype(jnp.float32),
                preferred_element_type=jnp.float32)
    y = y + b2_ref[...].astype(jnp.float32)                    # (N, D)

    # softmax over bins; the extra bins/bins.sum in the reference is a no-op.
    y = y - jnp.max(y, axis=-1, keepdims=True)
    e = jnp.exp(y)
    bins = e * pl.reciprocal(jnp.sum(e, axis=-1, keepdims=True), approx=False)

    # centers_k = min_depth + inclusive_cumsum(w)_k - 0.5 * w_k, with the
    # inclusive cumsum as a matmul against a precomputed upper-triangular ones
    # matrix (off the hot path).
    w = (max_depth - min_depth) * bins                         # (1?, N, D)
    csum = jnp.dot(w, tri_ref[...], preferred_element_type=jnp.float32)
    out_ref[...] = (min_depth + csum - 0.5 * w).astype(out_ref.dtype)


# --------------------------------------------------------------------------- #
# Wrapper
# --------------------------------------------------------------------------- #
def _per_buffer_budget_bytes():
    """Generation-aware per-buffer tile budget (best effort)."""
    budget = 4 << 20                       # v5e/v6e: ~4 MiB/buffer is at roofline
    try:
        info = pltpu.get_tpu_info()
        vmem = getattr(info, "vmem_capacity_bytes", None)
        if vmem is not None and vmem <= (64 << 20):
            # v7x-class (64 MiB VMEM, ~3 TB/s HBM): bigger tiles so per-step
            # overhead stays small; 2 x 8 MiB still fits the 32 MiB scoped VMEM.
            budget = 8 << 20
    except Exception:
        budget = 4 << 20
    return budget


def _pick_hw_tile(hw_eff, c, itemsize, budget_bytes):
    """Largest multiple-of-128 lane-tile within the VMEM budget (cdiv grid +
    in-kernel masking handles any remainder)."""
    if hw_eff <= 128:
        return hw_eff
    max_lanes = max(128, (budget_bytes // max(1, c * itemsize)) // 128 * 128)
    largest_aligned = (hw_eff // 128) * 128
    return int(min(max_lanes, largest_aligned))


def bcp_forward(x_nchw, w1, b1, w2, b2, *, max_depth, min_depth, hw_tile=None):
    """x_nchw: (N, C, H, W). w1: (C, HID), b1: (HID,), w2: (HID, D), b2: (D,).
    Returns (N, D, 1, 1) float32 bin centers."""
    N, C, H, W = x_nchw.shape
    HW = H * W
    HID = w1.shape[1]
    D = w2.shape[1]

    # Keep x in its native dtype (bf16 halves HBM traffic on the dominant cost).
    x_flat = x_nchw.reshape(N, C, HW)
    hw_valid = HW
    if HW < 128:  # tiny spatial extent: pad lanes up to one full group (zeros).
        x_flat = jnp.pad(x_flat, ((0, 0), (0, 0), (0, 128 - HW)))
    HW_eff = x_flat.shape[-1]

    if hw_tile is None:
        hw_tile = _pick_hw_tile(HW_eff, C, x_flat.dtype.itemsize,
                                _per_buffer_budget_bytes())
    assert hw_tile % 128 == 0 or hw_tile == HW_eff, (hw_tile, HW_eff)

    total_tiles = pl.cdiv(HW_eff, hw_tile)
    # Split the spatial reduction across a second "parallel" axis when the
    # batch axis alone can't feed both v7x TensorCores.
    n_split = 2 if (N == 1 and total_tiles >= 2) else 1
    tiles_per_split = pl.cdiv(total_tiles, n_split)
    needs_mask = (n_split * tiles_per_split * hw_tile) != hw_valid

    if n_split == 1:
        x_index_map = lambda n, s, k: (n, 0, k)
    else:
        x_index_map = lambda n, s, k: (
            n, 0, jnp.minimum(s * tiles_per_split + k, total_tiles - 1))

    # Raise the scoped VMEM limit only if the double-buffered tile needs it.
    tile_bytes = C * hw_tile * x_flat.dtype.itemsize
    est_vmem = 2 * tile_bytes + C * 128 * 4 + (1 << 20)
    vmem_kwargs = {}
    if est_vmem > (12 << 20):
        vmem_kwargs["vmem_limit_bytes"] = int(est_vmem + (4 << 20))

    pool_kernel = functools.partial(
        bcp_pool_kernel, hw_valid=hw_valid, tiles_per_split=tiles_per_split,
        needs_mask=needs_mask)

    pooled_sums = pl.pallas_call(
        pool_kernel,
        out_shape=jax.ShapeDtypeStruct((N, n_split, 1, C), jnp.float32),
        grid=(N, n_split, tiles_per_split),
        in_specs=[pl.BlockSpec((1, C, hw_tile), x_index_map)],
        out_specs=pl.BlockSpec((1, 1, 1, C), lambda n, s, k: (n, s, 0, 0)),
        scratch_shapes=[pltpu.VMEM((1, C, 128), jnp.float32)],
        compiler_params=pltpu.CompilerParams(
            dimension_semantics=("parallel", "parallel", "arbitrary"),
            **vmem_kwargs),
        cost_estimate=pl.CostEstimate(
            flops=int(N * C * HW),
            transcendentals=0,
            bytes_accessed=int(x_flat.size * x_flat.dtype.itemsize
                               + N * n_split * C * 4)),
    )(x_flat)

    # Tiny constants for the head.
    b1_2d = b1.reshape(1, HID)
    b2_2d = b2.reshape(1, D)
    idx = jnp.arange(D)
    tri = (idx[:, None] <= idx[None, :]).astype(jnp.float32)  # inclusive cumsum

    head_kernel = functools.partial(
        bcp_head_kernel, hw_total=HW, max_depth=float(max_depth),
        min_depth=float(min_depth))

    centers = pl.pallas_call(
        head_kernel,
        out_shape=jax.ShapeDtypeStruct((N, D), jnp.float32),
        grid=(1,),
        in_specs=[
            pl.BlockSpec((N, n_split, 1, C), lambda i: (0, 0, 0, 0)),
            pl.BlockSpec((C, HID), lambda i: (0, 0)),
            pl.BlockSpec((1, HID), lambda i: (0, 0)),
            pl.BlockSpec((HID, D), lambda i: (0, 0)),
            pl.BlockSpec((1, D), lambda i: (0, 0)),
            pl.BlockSpec((D, D), lambda i: (0, 0)),
        ],
        out_specs=pl.BlockSpec((N, D), lambda i: (0, 0)),
    )(pooled_sums, w1, b1_2d, w2, b2_2d, tri)

    return centers.reshape(N, D, 1, 1)


# --------------------------------------------------------------------------- #
# Reference + self-test
# --------------------------------------------------------------------------- #
def _reference_jax(x_nchw, w1, b1, w2, b2, max_depth, min_depth):
    N, C, H, W = x_nchw.shape
    x = jnp.mean(x_nchw.reshape(N, C, H * W).astype(jnp.float32), axis=2)
    x = jax.nn.gelu(x @ w1 + b1, approximate=False)
    x = x @ w2 + b2
    bins = jax.nn.softmax(x, axis=1)
    bins = bins / jnp.sum(bins, axis=1, keepdims=True)
    bw = (max_depth - min_depth) * bins
    bw = jnp.pad(bw, ((0, 0), (1, 0)), constant_values=min_depth)
    edges = jnp.cumsum(bw, axis=1)
    centers = 0.5 * (edges[:, :-1] + edges[:, 1:])
    return centers.reshape(N, -1, 1, 1)


def _make_params(key, C, HID, D):
    k1, k2, k3, k4 = jax.random.split(key, 4)
    w1 = jax.random.normal(k1, (C, HID), jnp.float32) * (1.0 / jnp.sqrt(C))
    b1 = jax.random.normal(k2, (HID,), jnp.float32) * 0.01
    w2 = jax.random.normal(k3, (HID, D), jnp.float32) * (1.0 / jnp.sqrt(HID))
    b2 = jax.random.normal(k4, (D,), jnp.float32) * 0.01
    return w1, b1, w2, b2


def _check(x, w1, b1, w2, b2, max_d, min_d, hw_tile=None):
    out = jax.block_until_ready(
        bcp_forward(x, w1, b1, w2, b2, max_depth=max_d, min_depth=min_d,
                    hw_tile=hw_tile))
    ref = _reference_jax(x, w1, b1, w2, b2, max_d, min_d)
    assert out.shape == ref.shape, (out.shape, ref.shape)
    assert jnp.allclose(out, ref, atol=2e-4, rtol=2e-4), \
        float(jnp.max(jnp.abs(out - ref)))


if __name__ == "__main__":
    MAX_DEPTH, MIN_DEPTH = 10.0, 0.1
    key = jax.random.PRNGKey(0)
    ka, kb, kc, kd, kp = jax.random.split(key, 5)

    # Case A: batch=2, C=32, 16x16 spatial, hidden=128, 16 bins.
    C, HID, D = 32, 128, 16
    w1, b1, w2, b2 = _make_params(kp, C, HID, D)
    xA = jax.random.normal(ka, (2, C, 16, 16), jnp.float32)
    _check(xA, w1, b1, w2, b2, MAX_DEPTH, MIN_DEPTH, hw_tile=128)  # multi-tile k loop
    _check(xA, w1, b1, w2, b2, MAX_DEPTH, MIN_DEPTH)               # auto tile

    # Case B: batch=1, 19x19 spatial -> spatial split across cores + masked
    # partial tile + clamped overflow tile.
    xB = jax.random.normal(kb, (1, C, 19, 19), jnp.float32)
    _check(xB, w1, b1, w2, b2, MAX_DEPTH, MIN_DEPTH, hw_tile=128)

    # Case C: tiny spatial extent (< 128 lanes) -> padded single tile.
    C2, HID2, D2 = 16, 32, 8
    w1c, b1c, w2c, b2c = _make_params(jax.random.PRNGKey(1), C2, HID2, D2)
    xC = jax.random.normal(kc, (1, C2, 8, 8), jnp.float32)
    _check(xC, w1c, b1c, w2c, b2c, MAX_DEPTH, MIN_DEPTH)

    # Case D: large single tile (>16 lane groups) -> fori_loop(unroll=8) path.
    C3, HID3, D3 = 8, 16, 8
    w1d, b1d, w2d, b2d = _make_params(jax.random.PRNGKey(2), C3, HID3, D3)
    xD = jax.random.normal(kd, (1, C3, 64, 64), jnp.float32)
    _check(xD, w1d, b1d, w2d, b2d, MAX_DEPTH, MIN_DEPTH)

    print("KERNEL_OK")
</pallas_src>

<mosaic_0001>
module attributes {stable_mosaic.version = 11 : i64} {
  func.func @bcp_pool_kernel(%arg0: i32, %arg1: i32, %arg2: i32, %arg3: memref<1x32x128xf32, #tpu.memory_space<vmem>>, %arg4: memref<1x1x1x32xf32, #tpu.memory_space<vmem>>, %arg5: memref<1x32x128xf32, #tpu.memory_space<vmem>>) attributes {dimension_semantics = [#tpu.dimension_semantics<parallel>, #tpu.dimension_semantics<parallel>, #tpu.dimension_semantics<arbitrary>], iteration_bounds = array<i64: 2, 1, 2>, scalar_prefetch = 0 : i64, scratch_operands = 1 : i64, tpu.core_type = #tpu.core_type<tc>, window_params = [{transform_indices = @transform_0, window_bounds = array<i64: 1, 32, 128>}, {transform_indices = @transform_1, window_bounds = array<i64: 1, 1, 1, 32>}]} {
    %c0_i32 = arith.constant 0 : i32
    %0 = arith.cmpi eq, %arg2, %c0_i32 : i32
    %1 = arith.extui %0 : i1 to i32
    %c0_i32_0 = arith.constant 0 : i32
    %2 = arith.cmpi ne, %1, %c0_i32_0 : i32
    scf.if %2 {
      %cst = arith.constant 0.000000e+00 : f32
      %10 = vector.broadcast %cst : f32 to vector<1x32x128xf32>
      %c0_10 = arith.constant 0 : index
      %c0_11 = arith.constant 0 : index
      %c0_12 = arith.constant 0 : index
      %11 = vector.load %arg5[%c0_10, %c0_11, %c0_12] : memref<1x32x128xf32, #tpu.memory_space<vmem>>, vector<1x32x128xf32>
      tpu.vector_store %arg5[%c0_10, %c0_11, %c0_12], %10 {strides = array<i32>} : memref<1x32x128xf32, #tpu.memory_space<vmem>>, vector<1x32x128xf32>,
    } else {
    }
    %c0 = arith.constant 0 : index
    %c0_1 = arith.constant 0 : index
    %c0_2 = arith.constant 0 : index
    %3 = vector.load %arg3[%c0, %c0_1, %c0_2] : memref<1x32x128xf32, #tpu.memory_space<vmem>>, vector<1x32x128xf32>
    %c0_3 = arith.constant 0 : index
    %c0_4 = arith.constant 0 : index
    %c0_5 = arith.constant 0 : index
    %4 = vector.load %arg5[%c0_3, %c0_4, %c0_5] : memref<1x32x128xf32, #tpu.memory_space<vmem>>, vector<1x32x128xf32>
    %5 = arith.addf %4, %3 : vector<1x32x128xf32>
    %c0_6 = arith.constant 0 : index
    %c0_7 = arith.constant 0 : index
    %c0_8 = arith.constant 0 : index
    %6 = vector.load %arg5[%c0_6, %c0_7, %c0_8] : memref<1x32x128xf32, #tpu.memory_space<vmem>>, vector<1x32x128xf32>
    tpu.vector_store %arg5[%c0_6, %c0_7, %c0_8], %5 {strides = array<i32>} : memref<1x32x128xf32, #tpu.memory_space<vmem>>, vector<1x32x128xf32>,
    %c1_i32 = arith.constant 1 : i32
    %7 = arith.cmpi eq, %arg2, %c1_i32 : i32
    %8 = arith.extui %7 : i1 to i32
    %c0_i32_9 = arith.constant 0 : i32
    %9 = arith.cmpi ne, %8, %c0_i32_9 : i32
    scf.if %9 {
      %c0_10 = arith.constant 0 : index
      %c0_11 = arith.constant 0 : index
      %c0_12 = arith.constant 0 : index
      %10 = vector.load %arg5[%c0_10, %c0_11, %c0_12] : memref<1x32x128xf32, #tpu.memory_space<vmem>>, vector<1x32x128xf32>
      %cst = arith.constant dense<0.000000e+00> : vector<1x32xf32>
      %11 = vector.multi_reduction <add>, %10, %cst [2] : vector<1x32x128xf32> to vector<1x32xf32>
      %12 = vector.shape_cast %11 : vector<1x32xf32> to vector<1x1x1x32xf32>
      %c0_13 = arith.constant 0 : index
      %c0_14 = arith.constant 0 : index
      %c0_15 = arith.constant 0 : index
      %c0_16 = arith.constant 0 : index
      %13 = vector.load %arg4[%c0_13, %c0_14, %c0_15, %c0_16] : memref<1x1x1x32xf32, #tpu.memory_space<vmem>>, vector<1x1x1x32xf32>
      tpu.vector_store %arg4[%c0_13, %c0_14, %c0_15, %c0_16], %12 {strides = array<i32>} : memref<1x1x1x32xf32, #tpu.memory_space<vmem>>, vector<1x1x1x32xf32>,
    } else {
    }
    return
  }
  func.func @transform_0(%arg0: i32, %arg1: i32, %arg2: i32) -> (i32, i32, i32) {
    %c0_i32 = arith.constant 0 : i32
    %c0_i32_0 = arith.constant 0 : i32
    return %arg0, %c0_i32, %arg2 : i32, i32, i32
  }
  func.func @transform_1(%arg0: i32, %arg1: i32, %arg2: i32) -> (i32, i32, i32, i32) {
    %c0_i32 = arith.constant 0 : i32
    %c0_i32_0 = arith.constant 0 : i32
    %c0_i32_1 = arith.constant 0 : i32
    return %arg0, %arg1, %c0_i32, %c0_i32_0 : i32, i32, i32, i32
  }
}

</mosaic_0001>

<llo_original>
// kernel: tpu_custom_call.1
$region0: #{tpu_custom_call.1}
  #allocation0 [shape = 'u32[]', space=smem, size = 0x4, offset = 0x4, fixed_abs, tag = 'smem constant byte address 0x4 - core index']
  #allocation1 [shape = 'u32[72,128]{1,0:T(1,128)}', space=vmem, size = 0x9000, scoped, tag = 'internal scratch']
  #allocation2 [shape = 'f32[1,32,128]{2,1,0:T(8,128)}', space=vmem, size = 0x4000, scoped, tag = 'scratch operand']
  %s0 = inlined_call_operand.hbm [shape: f32[2,32,256], index: 0, kind: input, shape index: {}]
  %s1 = inlined_call_operand.hbm [shape: f32[2,1,1,32], index: 1, kind: output, shape index: {}]
  %s2 = sld [smem:[#allocation0]]
  $region49: #{tpu_custom_call.1} parent=0
    _
  %s4 = ssub.s32 1, %s2
  %s5 = scalar_select 0, %s4, %s2
  $region1: #{tpu_custom_call.1} parent=0
    #allocation3 [shape = 'u8[32768]{0}', space=vmem, size = 0x8000, scoped, tag = 'input window, operand 0']
    #allocation4 [shape = 's32[2]{0}', space=sflag, size = 0x8, scoped, tag = 'scoped memory for tpu_custom_call.1']
    #allocation5 [shape = 's32[2]{0}', space=sflag, size = 0x8, scoped, tag = 'scoped memory for tpu_custom_call.1']
    #allocation6 [shape = 'u8[1024]{0}', space=vmem, size = 0x400, scoped, tag = 'output window, operand 0']
    %6 = vsyncpa [#allocation4], 0
    %s7 = scalar_lea.sflag [#allocation4], 1
    %8 = vsyncpa %s7, 0
    %9 = vsyncpa [#allocation5], 0
    %s10 = scalar_lea.sflag [#allocation5], 1
    %11 = vsyncpa %s10, 0
    loop: start=0, step=1, limit=6
    $region2: #{tpu_custom_call.1} parent=1 // loop_pre_header
      _
    $region3: #{tpu_custom_call.1} parent=1 // loop_header
      %s13 = sphi 0, %s17
      %p14 = scmp.ge.s32.totalorder %s13, 6
      %s20 = sphi 0, %s39
      %s21 = sphi 0, %s35
      %s22 = sphi 0, %s31
      %s23 = sphi 0, %s20
      %s24 = sphi 0, %s21
      %s25 = sphi 0, %s22
      %s26 = sphi 0, %s23
      %s27 = sphi 0, %s24
      %s28 = sphi 0, %s25
      %s44 = sphi 0, %s46
      %s47 = sphi 0, %s44
      %s48 = sphi 0, %s47
      %s64 = sphi 0, %s48
      %s72 = sphi 0, %s74
      %s75 = sphi 0, %s72
      %s76 = sphi 0, %s75
      %s92 = sphi 0, %s76
    $region4: #{tpu_custom_call.1} parent=1 // loop_header_branch
      %16 = sbr.rel (%p14) target = $region8
    $region5: #{tpu_custom_call.1} parent=1 // loop_body
      %s18 = ssub.s32 %s13, 1
      %s19 = ssub.s32 %s13, 2
      %s29 = sadd.s32 1, %s22
      %p30 = scmp.ge.s32.totalorder %s29, 2
      %s31 = scalar_select %p30, 0, %s29
      %s32 = sadd.s32 1, %s21
      %s33 = scalar_select %p30, %s32, %s21
      %p34 = scmp.ge.s32.totalorder %s33, 1
      %s35 = scalar_select %p34, 0, %s33
      %s36 = sadd.s32 1, %s20
      %s37 = scalar_select %p34, %s36, %s20
      %p38 = scmp.ge.s32.totalorder %s37, 2
      %s39 = scalar_select %p38, 0, %s37
      %s40 = ssub.s32 %s20, %s39
      %s41 = ssub.s32 %s22, %s31
      %s42 = sor.u32 %s40, %s41
      %p43 = scmp.eq.s32.totalorder %s42, 0
      %s45 = sadd.s32 %s44, 1
      %s46 = scalar_select %p43, %s44, %s45
      %p49 = pneg %p43
      %p50 = scmp.eq.s32.totalorder %s13, 3
      %p51 = por %p49, %p50
      %p52 = scmp.ne.s32.totalorder %s44, %s47
      %p53 = scmp.eq.s32.totalorder %s13, 0
      %p54 = por %p52, %p53
      %p55 = scmp.ne.s32.totalorder %s44, %s47
      %p56 = scmp.eq.s32.totalorder %s18, 3
      %p57 = por %p55, %p56
      %p58 = scmp.ne.s32.totalorder %s47, %s48
      %p59 = scmp.eq.s32.totalorder %s18, 0
      %p60 = por %p58, %p59
      %p61 = scmp.ne.s32.totalorder %s47, %s48
      %p62 = scmp.eq.s32.totalorder %s19, 3
      %p63 = por %p61, %p62
      %p65 = scmp.ne.s32.totalorder %s48, %s64
      %p66 = scmp.eq.s32.totalorder %s19, 0
      %p67 = por %p65, %p66
      %s68 = ssub.s32 %s20, %s39
      %s69 = ssub.s32 %s21, %s35
      %s70 = sor.u32 %s68, %s69
      %p71 = scmp.eq.s32.totalorder %s70, 0
      %s73 = sadd.s32 %s72, 1
      %s74 = scalar_select %p71, %s72, %s73
      %p77 = pneg %p71
      %p78 = scmp.eq.s32.totalorder %s13, 3
      %p79 = por %p77, %p78
      %p80 = scmp.ne.s32.totalorder %s72, %s75
      %p81 = scmp.eq.s32.totalorder %s13, 0
      %p82 = por %p80, %p81
      %p83 = scmp.ne.s32.totalorder %s72, %s75
      %p84 = scmp.eq.s32.totalorder %s18, 3
      %p85 = por %p83, %p84
      %p86 = scmp.ne.s32.totalorder %s75, %s76
      %p87 = scmp.eq.s32.totalorder %s18, 0
      %p88 = por %p86, %p87
      %p89 = scmp.ne.s32.totalorder %s75, %s76
      %p90 = scmp.eq.s32.totalorder %s19, 3
      %p91 = por %p89, %p90
      %p93 = scmp.ne.s32.totalorder %s76, %s92
      %p94 = scmp.eq.s32.totalorder %s19, 0
      %p95 = por %p93, %p94
      %p96 = scmp.le.s32.totalorder 1, %s13
      %p97 = scmp.lt.s32.totalorder %s13, 5
      %p98 = pnand %p96, %p97
      %p99 = pneg %p98
      // Predicated region
      $region9: #{tpu_custom_call.1} parent=5 // pred_check
        _
      $region10: #{tpu_custom_call.1} parent=5 // pred_check_branch
        %101 = sbr.rel (%p98) target = $region12
      $region11: #{tpu_custom_call.1} parent=5 // pred_region
        %s102 = ssub.s32 %s13, 1
      $region12: #{tpu_custom_call.1} parent=5 // pred_fallthru
        _
      %p103 = scmp.lt.s32.totalorder %s13, 4
      // Predicated region
      $region13: #{tpu_custom_call.1} parent=5 // pred_check
        %p104 = pneg %p103
      $region14: #{tpu_custom_call.1} parent=5 // pred_check_branch
        %106 = sbr.rel (%p104) target = $region16
      $region15: #{tpu_custom_call.1} parent=5 // pred_region
        // Predicated region
        $region17: #{tpu_custom_call.1} parent=15 // pred_check
          %p107 = pneg %p54
        $region18: #{tpu_custom_call.1} parent=15 // pred_check_branch
          %109 = sbr.rel (%p107) target = $region20
        $region19: #{tpu_custom_call.1} parent=15 // pred_region
          %s110 = sand.u32 %s44, 1
          %s111 = scalar_lea.sflag [#allocation4], %s110
          %s112 = sand.u32 %s44, 1
          %s113 = smul.addr %s112, 32
          %s114 = scalar_lea.vmem [#allocation3], %s113
          %116 = vsyncadd %s111, 0
          %s117 = smul.addr %s20, 8
          %s118 = sadd.s32 %s22, %s117
          %s119 = smul.addr %s118, 8
          %s120 = scalar_lea.hbm %s0, %s119
          %s121 = sshll.u32 %s120, 4
          %s122 = int_to_ptr.hbm [resolvable:$true] %s121
          %s123 = sshll.u32 %s114, 4
          %s124 = int_to_ptr.vmem [resolvable:$true] %s123
          %129 = dma.hbm_to_vmem [thread:$0]  %s122, 512, %s124, %s111, 256, 128, 8
        $region20: #{tpu_custom_call.1} parent=15 // pred_fallthru
          _
      $region16: #{tpu_custom_call.1} parent=5 // pred_fallthru
        _
      %p130 = scmp.le.s32.totalorder 1, %s13
      %p131 = scmp.lt.s32.totalorder %s13, 5
      %p132 = pnand %p130, %p131
      %p133 = pneg %p132
      // Predicated region
      $region21: #{tpu_custom_call.1} parent=5 // pred_check
        _
      $region22: #{tpu_custom_call.1} parent=5 // pred_check_branch
        %135 = sbr.rel (%p132) target = $region24
      $region23: #{tpu_custom_call.1} parent=5 // pred_region
        %s136 = ssub.s32 %s13, 1
        %s137 = sand.u32 %s47, 1
        %s138 = scalar_lea.sflag [#allocation4], %s137
        %s139 = sand.u32 %s47, 1
        %s140 = smul.addr %s139, 32
        %s141 = scalar_lea.vmem [#allocation3], %s140
        // Predicated region
        $region25: #{tpu_custom_call.1} parent=23 // pred_check
          %p142 = pneg %p60
        $region26: #{tpu_custom_call.1} parent=23 // pred_check_branch
          %144 = sbr.rel (%p142) target = $region28
        $region27: #{tpu_custom_call.1} parent=23 // pred_region
          %146 = dma.done %s138, 512
        $region28: #{tpu_custom_call.1} parent=23 // pred_fallthru
          _
        %s147 = sand.u32 %s47, 1
        %s148 = scalar_lea.sflag [#allocation4], %s147
        %s149 = sand.u32 %s47, 1
        %s150 = smul.addr %s149, 32
        %s151 = scalar_lea.vmem [#allocation3], %s150
        %p152 = pneg %p60
        %p153 = pneg %p57
        %p154 = pneg %p88
        %p155 = pneg %p85
        %s156 = sand.u32 %s75, 1
        %s157 = scalar_lea.sflag [#allocation5], %s156
        %s158 = sand.u32 %s75, 1
        %s159 = scalar_lea.vmem [#allocation6], %s158
        %p160 = scmp.eq.s32.totalorder %s25, 0
        // Predicated region
        $region29: #{tpu_custom_call.1} parent=23 // pred_check
          %p161 = pneg %p160
        $region30: #{tpu_custom_call.1} parent=23 // pred_check_branch
          %163 = sbr.rel (%p161) target = $region32
        $region31: #{tpu_custom_call.1} parent=23 // pred_region
          %164 = vst [vmem:[#allocation2] sm:$0xff] 0.0
          %165 = vst [vmem:[#allocation2 + $0x8] sm:$0xff] 0.0
          %166 = vst [vmem:[#allocation2 + $0x10] sm:$0xff] 0.0
          %167 = vst [vmem:[#allocation2 + $0x18] sm:$0xff] 0.0
        $region32: #{tpu_custom_call.1} parent=23 // pred_fallthru
          _
        %v168 = vld [vmem:[%s141] sm:$0xff]
        %v169 = vld [vmem:[%s141 + $0x8] sm:$0xff]
        %v170 = vld [vmem:[%s141 + $0x10] sm:$0xff]
        %v171 = vld [vmem:[%s141 + $0x18] sm:$0xff]
        %v172 = vld [vmem:[#allocation2] sm:$0xff]
        %v173 = vld [vmem:[#allocation2 + $0x8] sm:$0xff]
        %v174 = vld [vmem:[#allocation2 + $0x10] sm:$0xff]
        %v175 = vld [vmem:[#allocation2 + $0x18] sm:$0xff]
        %v176 = vadd.f32 %v172, %v168
        %v177 = vadd.f32 %v173, %v169
        %v178 = vadd.f32 %v174, %v170
        %v179 = vadd.f32 %v175, %v171
        %180 = vst [vmem:[#allocation2] sm:$0xff] %v176
        %181 = vst [vmem:[#allocation2 + $0x8] sm:$0xff] %v177
        %182 = vst [vmem:[#allocation2 + $0x10] sm:$0xff] %v178
        %183 = vst [vmem:[#allocation2 + $0x18] sm:$0xff] %v179
        %p184 = scmp.eq.s32.totalorder %s25, 1
        // Predicated region
        $region33: #{tpu_custom_call.1} parent=23 // pred_check
          %p185 = pneg %p184
        $region34: #{tpu_custom_call.1} parent=23 // pred_check_branch
          %187 = sbr.rel (%p185) target = $region36
        $region35: #{tpu_custom_call.1} parent=23 // pred_region
          %v188 = vld [vmem:[#allocation2] sm:$0xff]
          %v189 = vld [vmem:[#allocation2 + $0x8] sm:$0xff]
          %v190 = vld [vmem:[#allocation2 + $0x10] sm:$0xff]
          %v191 = vld [vmem:[#allocation2 + $0x18] sm:$0xff]
          %192 = vadd.xlane.f32.xlu0 %v188
          %v193 = vpop.xlane.xlu0 %192
          %194 = vadd.xlane.f32.xlu0 %v189
          %v195 = vpop.xlane.xlu0 %194
          %196 = vadd.xlane.f32.xlu0 %v190
          %v197 = vpop.xlane.xlu0 %196
          %198 = vadd.xlane.f32.xlu0 %v191
          %v199 = vpop.xlane.xlu0 %198
          %v204 = vlaneseq
          %v205 = vand.u32 %v204, 127
          %v206 = vperm.slane %v193, %v205
          %v207 = vadd.s32 %v205, 4294967288
          %v208 = vperm.slane %v195, %v207
          %vm209 = vcmask 130112
          %v210 = vsel %vm209, %v208, %v206
          %v211 = vadd.s32 %v205, 4294967280
          %v212 = vperm.slane %v197, %v211
          %vm213 = vcmask 195712
          %v214 = vsel %vm213, %v212, %v210
          %v215 = vadd.s32 %v205, 4294967272
          %v216 = vperm.slane %v199, %v215
          %vm217 = vcmask 261312
          %v218 = vsel %vm217, %v216, %v214
          %vm220 = vcmask 253952
          %221 = vst.msk [vmem:[%s159] sm:$0x1] %vm220, %v218
        $region36: #{tpu_custom_call.1} parent=23 // pred_fallthru
          _
        %s222 = sand.u32 %s75, 1
        %s223 = scalar_lea.sflag [#allocation5], %s222
        %s224 = sand.u32 %s75, 1
        %s225 = scalar_lea.vmem [#allocation6], %s224
        // Predicated region
        $region37: #{tpu_custom_call.1} parent=23 // pred_check
          %p226 = pneg %p85
        $region38: #{tpu_custom_call.1} parent=23 // pred_check_branch
          %228 = sbr.rel (%p226) target = $region40
        $region39: #{tpu_custom_call.1} parent=23 // pred_region
          %230 = vsyncadd %s223, 0
          %s231 = sadd.s32 %s24, %s23
          %s232 = scalar_lea.hbm %s1, %s231
          %s234 = sshll.u32 %s225, 4
          %s235 = int_to_ptr.vmem [resolvable:$true] %s234
          %s236 = sshll.u32 %s232, 4
          %s237 = int_to_ptr.hbm [resolvable:$true] %s236
          %239 = dma.vmem_to_hbm [thread:$0]  %s235, 16, %s237, %s223
        $region40: #{tpu_custom_call.1} parent=23 // pred_fallthru
          _
      $region24: #{tpu_custom_call.1} parent=5 // pred_fallthru
        _
      %p240 = scmp.le.s32.totalorder 2, %s13
      // Predicated region
      $region41: #{tpu_custom_call.1} parent=5 // pred_check
        %p241 = pneg %p240
      $region42: #{tpu_custom_call.1} parent=5 // pred_check_branch
        %243 = sbr.rel (%p241) target = $region44
      $region43: #{tpu_custom_call.1} parent=5 // pred_region
        %s244 = ssub.s32 %s13, 2
        // Predicated region
        $region45: #{tpu_custom_call.1} parent=43 // pred_check
          %p245 = pneg %p91
        $region46: #{tpu_custom_call.1} parent=43 // pred_check_branch
          %247 = sbr.rel (%p245) target = $region48
        $region47: #{tpu_custom_call.1} parent=43 // pred_region
          %s248 = sand.u32 %s76, 1
          %s249 = scalar_lea.sflag [#allocation5], %s248
          %s250 = sand.u32 %s76, 1
          %s251 = scalar_lea.vmem [#allocation6], %s250
          %253 = dma.done %s249, 16
        $region48: #{tpu_custom_call.1} parent=43 // pred_fallthru
          _
      $region44: #{tpu_custom_call.1} parent=5 // pred_fallthru
        _
    $region6: #{tpu_custom_call.1} parent=1 // loop_footer
      %s17 = sadd.s32 1, %s13
    $region7: #{tpu_custom_call.1} parent=1 // loop_footer_branch
      %12 = sbr.rel target = $region3
    $region8: #{tpu_custom_call.1} parent=1 // loop_exit
      _
    %254 = vsyncpa [#allocation4], 1
    %s255 = scalar_lea.sflag [#allocation4], 1
    %256 = vsyncpa %s255, 1
    %257 = vsyncpa [#allocation5], 1
    %s258 = scalar_lea.sflag [#allocation5], 1
    %259 = vsyncpa %s258, 1

</llo_original>
